<compile_context>
chip_gen: v5e
topology: v5e:2x2
jax: 0.10.0
libtpu: 0.0.40
codegen_flags: <defaults>
</compile_context>

<pallas_src>
from functools import partial

import jax
import jax.numpy as jnp
from jax.experimental import pallas as pl
from jax.experimental.pallas import tpu as pltpu


def _softplus(x):
    # matches torch.nn.functional.softplus (beta=1, threshold=20).
    # For x > 20 the where() selects x; exp(x) may be inf but log1p(inf)=inf is
    # discarded by the select, so no NaNs and one fewer VPU op than clamping.
    return jnp.where(x > 20.0, x, jnp.log1p(jnp.exp(x)))


def mlp_focuspoints_kernel(x_ref, p_ref, o_ref):
    # Input block: (2, TN) with the batch on the lane axis.
    x0 = x_ref[0:1, :]                       # (1, TN)
    x1 = x_ref[1:2, :]                       # (1, TN)

    # --- fc1 (2 -> 32): K=2, two broadcast FMAs on the VPU ---
    w1 = p_ref[0:32, 0:2]                    # (32, 2)  torch layout (out, in)
    b1 = p_ref[0:32, 2:3]                    # (32, 1)
    h1 = _softplus(w1[:, 0:1] * x0 + w1[:, 1:2] * x1 + b1)      # (32, TN)

    # --- fc2 (32 -> 16): MXU ---
    w2 = p_ref[32:48, 0:32]                  # (16, 32)
    b2 = p_ref[32:48, 32:33]                 # (16, 1)
    h2 = _softplus(jnp.dot(w2, h1, preferred_element_type=jnp.float32) + b2)  # (16, TN)

    # --- fc3 (16 -> 3): MXU, output rows zero-padded to 8 in the slab ---
    w3p = p_ref[48:56, 0:16]                 # (8, 16)  = 0.5*w3 padded with zeros
    b3 = p_ref[48:51, 16:17]                 # (3, 1)   = 0.5*b3
    scale = p_ref[48:51, 17:18]              # (3, 1)
    z8 = jnp.dot(w3p, h2, preferred_element_type=jnp.float32)   # (8, TN)

    # (2*sigmoid(z) - 1) * scale  ==  tanh(z/2) * scale; 0.5 folded into w3/b3.
    y = jnp.tanh(z8[0:3, :] + b3) * scale    # (3, TN)
    o_ref[...] = y.astype(o_ref.dtype)


@partial(jax.jit, static_argnames=("block_n",))
def focuspoints_forward(x, packed_params, *, block_n=2048):
    n = x.shape[0]

    # Pick the tile count/size to minimize padding (kernel is compute-bound, so
    # padded lanes cost full softplus/tanh work), then round the tile up to a
    # multiple of 128 lanes.  Force >=2 grid steps for larger batches so both
    # TensorCores get work on v7x (harmless on v5e/v6e: ~0.35us per extra step).
    num_tiles = pl.cdiv(n, block_n)
    if n > 256:
        num_tiles = max(num_tiles, 2)
    tn = ((pl.cdiv(n, num_tiles) + 127) // 128) * 128
    n_pad = num_tiles * tn
    grid = (num_tiles,)

    # Transpose to lane-dense (features, batch) and zero-pad the batch axis.
    xt = jnp.zeros((2, n_pad), jnp.float32).at[:, :n].set(x.T.astype(jnp.float32))
    # TODO(synk): for latency-critical tiny batches, accept (2,N)/(3,N) layouts
    # at the API boundary to avoid the separate transpose/pad XLA ops.

    out_t = pl.pallas_call(
        mlp_focuspoints_kernel,
        out_shape=jax.ShapeDtypeStruct((3, n_pad), jnp.float32),
        grid_spec=pltpu.PrefetchScalarGridSpec(
            num_scalar_prefetch=0,
            grid=grid,
            in_specs=[
                pl.BlockSpec((2, tn), lambda i: (0, i)),              # x tile
                pl.BlockSpec(packed_params.shape, lambda i: (0, 0)),  # param slab (constant)
            ],
            out_specs=pl.BlockSpec((3, tn), lambda i: (0, i)),
        ),
        compiler_params=pltpu.CompilerParams(
            dimension_semantics=("parallel",)),
    )(xt, packed_params)

    return out_t[:, :n].T                    # back to (N, 3)


def init_params(key):
    """Deterministic init mimicking torch.nn.Linear (uniform(-1/sqrt(fan_in), +)).
    Weights stored torch-style as (out_features, in_features)."""
    def linear(k, fan_in, fan_out):
        kw, kb = jax.random.split(k)
        bound = 1.0 / jnp.sqrt(float(fan_in))
        w = jax.random.uniform(kw, (fan_out, fan_in), jnp.float32, -bound, bound)
        b = jax.random.uniform(kb, (fan_out,), jnp.float32, -bound, bound)
        return w, b

    k1, k2, k3 = jax.random.split(key, 3)
    w1, b1 = linear(k1, 2, 32)
    w2, b2 = linear(k2, 32, 16)
    w3, b3 = linear(k3, 16, 3)
    scale = jnp.array([0.1, 0.1, 1.0], dtype=jnp.float32)   # non-trainable buffer
    return (w1, b1, w2, b2, w3, b3, scale)


def pack_params(w1, b1, w2, b2, w3, b3, scale):
    """Pack all parameters into a single (8,128)-aligned f32 VMEM slab.
    fc3 weight/bias are pre-scaled by 0.5 (tanh(z/2) trick) and the weight is
    zero-padded to 8 output rows so fc3 can run as a single MXU matmul."""
    slab = jnp.zeros((56, 128), jnp.float32)
    slab = slab.at[0:32, 0:2].set(w1)            # (32, 2)
    slab = slab.at[0:32, 2].set(b1)              # (32,)
    slab = slab.at[32:48, 0:32].set(w2)          # (16, 32)
    slab = slab.at[32:48, 32].set(b2)            # (16,)
    slab = slab.at[48:51, 0:16].set(0.5 * w3)    # (3, 16), rows 51:56 stay zero
    slab = slab.at[48:51, 16].set(0.5 * b3)      # (3,)
    slab = slab.at[48:51, 17].set(scale)         # (3,)
    return slab


def reference_forward(x, params):
    w1, b1, w2, b2, w3, b3, scale = params
    h = jax.nn.softplus(x @ w1.T + b1)
    h = jax.nn.softplus(h @ w2.T + b2)
    z = h @ w3.T + b3
    return (2.0 * jax.nn.sigmoid(z) - 1.0) * scale


if __name__ == "__main__":
    key = jax.random.PRNGKey(0)
    kp, kx = jax.random.split(key)
    params = init_params(kp)
    packed = pack_params(*params)

    # small batch of 2-D inputs (module maps R^2 -> R^3)
    x = jax.random.normal(kx, (8, 2), dtype=jnp.float32)
    out = jax.block_until_ready(focuspoints_forward(x, packed))
    ref = reference_forward(x, params)
    assert out.shape == (8, 3)
    assert jnp.allclose(out, ref, atol=2e-5, rtol=2e-5)

    # also exercise the multi-step grid path (3 lane tiles of 128) + batch padding
    x2 = jax.random.normal(jax.random.PRNGKey(1), (260, 2), dtype=jnp.float32)
    out2 = jax.block_until_ready(focuspoints_forward(x2, packed, block_n=128))
    ref2 = reference_forward(x2, params)
    assert out2.shape == (260, 3)
    assert jnp.allclose(out2, ref2, atol=2e-5, rtol=2e-5)

    print("KERNEL_OK")
</pallas_src>

<mosaic_0001>
module attributes {stable_mosaic.version = 11 : i64} {
  func.func @mlp_focuspoints_kernel(%arg0: i32, %arg1: memref<2x128xf32, #tpu.memory_space<vmem>>, %arg2: memref<56x128xf32, #tpu.memory_space<vmem>>, %arg3: memref<3x128xf32, #tpu.memory_space<vmem>>) attributes {dimension_semantics = [#tpu.dimension_semantics<parallel>], iteration_bounds = array<i64: 1>, scalar_prefetch = 0 : i64, scratch_operands = 0 : i64, tpu.core_type = #tpu.core_type<tc>, window_params = [{transform_indices = @transform_0, window_bounds = array<i64: 2, 128>}, {pipeline_mode = #tpu.pipeline_mode<synchronous>, transform_indices = @transform_1, window_bounds = array<i64: 56, 128>}, {transform_indices = @transform_2, window_bounds = array<i64: 3, 128>}]} {
    %c0 = arith.constant 0 : index
    %c0_0 = arith.constant 0 : index
    %0 = vector.load %arg1[%c0, %c0_0] : memref<2x128xf32, #tpu.memory_space<vmem>>, vector<1x128xf32>
    %c1 = arith.constant 1 : index
    %c0_1 = arith.constant 0 : index
    %1 = vector.load %arg1[%c1, %c0_1] : memref<2x128xf32, #tpu.memory_space<vmem>>, vector<1x128xf32>
    %c0_2 = arith.constant 0 : index
    %c0_3 = arith.constant 0 : index
    %2 = vector.load %arg2[%c0_2, %c0_3] : memref<56x128xf32, #tpu.memory_space<vmem>>, vector<32x2xf32>
    %c0_4 = arith.constant 0 : index
    %c2 = arith.constant 2 : index
    %3 = vector.load %arg2[%c0_4, %c2] : memref<56x128xf32, #tpu.memory_space<vmem>>, vector<32x1xf32>
    %4 = vector.extract_strided_slice %2 {offsets = [0, 0], sizes = [32, 1], strides = [1, 1]} : vector<32x2xf32> to vector<32x1xf32>
    %5 = vector.broadcast %4 : vector<32x1xf32> to vector<32x128xf32>
    %6 = vector.broadcast %0 : vector<1x128xf32> to vector<32x128xf32>
    %7 = arith.mulf %5, %6 : vector<32x128xf32>
    %8 = vector.extract_strided_slice %2 {offsets = [0, 1], sizes = [32, 1], strides = [1, 1]} : vector<32x2xf32> to vector<32x1xf32>
    %9 = vector.broadcast %8 : vector<32x1xf32> to vector<32x128xf32>
    %10 = vector.broadcast %1 : vector<1x128xf32> to vector<32x128xf32>
    %11 = arith.mulf %9, %10 : vector<32x128xf32>
    %12 = arith.addf %7, %11 : vector<32x128xf32>
    %13 = vector.broadcast %3 : vector<32x1xf32> to vector<32x128xf32>
    %14 = arith.addf %12, %13 : vector<32x128xf32>
    %cst = arith.constant 2.000000e+01 : f32
    %15 = vector.broadcast %cst : f32 to vector<32x128xf32>
    %16 = arith.cmpf ogt, %14, %15 : vector<32x128xf32>
    %17 = math.exp %14 : vector<32x128xf32>
    %18 = math.log1p %17 : vector<32x128xf32>
    %19 = arith.select %16, %14, %18 : vector<32x128xi1>, vector<32x128xf32>
    %c32 = arith.constant 32 : index
    %c0_5 = arith.constant 0 : index
    %20 = vector.load %arg2[%c32, %c0_5] : memref<56x128xf32, #tpu.memory_space<vmem>>, vector<16x32xf32>
    %c32_6 = arith.constant 32 : index
    %c32_7 = arith.constant 32 : index
    %21 = vector.load %arg2[%c32_6, %c32_7] : memref<56x128xf32, #tpu.memory_space<vmem>>, vector<16x1xf32>
    %cst_8 = arith.constant dense<0.000000e+00> : vector<16x128xf32>
    %22 = tpu.matmul %20, %19, %cst_8 {dimension_numbers = #tpu.dot_dimension_numbers<[1], [0], [0], [1], [0, 0, 1, 1], [], []>} : vector<16x32xf32>, vector<32x128xf32>, vector<16x128xf32> -> vector<16x128xf32>
    %23 = vector.broadcast %21 : vector<16x1xf32> to vector<16x128xf32>
    %24 = arith.addf %22, %23 : vector<16x128xf32>
    %cst_9 = arith.constant 2.000000e+01 : f32
    %25 = vector.broadcast %cst_9 : f32 to vector<16x128xf32>
    %26 = arith.cmpf ogt, %24, %25 : vector<16x128xf32>
    %27 = math.exp %24 : vector<16x128xf32>
    %28 = math.log1p %27 : vector<16x128xf32>
    %29 = arith.select %26, %24, %28 : vector<16x128xi1>, vector<16x128xf32>
    %c48 = arith.constant 48 : index
    %c0_10 = arith.constant 0 : index
    %30 = vector.load %arg2[%c48, %c0_10] : memref<56x128xf32, #tpu.memory_space<vmem>>, vector<8x16xf32>
    %c48_11 = arith.constant 48 : index
    %c16 = arith.constant 16 : index
    %31 = vector.load %arg2[%c48_11, %c16] : memref<56x128xf32, #tpu.memory_space<vmem>>, vector<3x1xf32>
    %c48_12 = arith.constant 48 : index
    %c17 = arith.constant 17 : index
    %32 = vector.load %arg2[%c48_12, %c17] : memref<56x128xf32, #tpu.memory_space<vmem>>, vector<3x1xf32>
    %cst_13 = arith.constant dense<0.000000e+00> : vector<8x128xf32>
    %33 = tpu.matmul %30, %29, %cst_13 {dimension_numbers = #tpu.dot_dimension_numbers<[1], [0], [0], [1], [0, 0, 1, 1], [], []>} : vector<8x16xf32>, vector<16x128xf32>, vector<8x128xf32> -> vector<8x128xf32>
    %34 = vector.extract_strided_slice %33 {offsets = [0, 0], sizes = [3, 128], strides = [1, 1]} : vector<8x128xf32> to vector<3x128xf32>
    %35 = vector.broadcast %31 : vector<3x1xf32> to vector<3x128xf32>
    %36 = arith.addf %34, %35 : vector<3x128xf32>
    %37 = math.tanh %36 : vector<3x128xf32>
    %38 = vector.broadcast %32 : vector<3x1xf32> to vector<3x128xf32>
    %39 = arith.mulf %37, %38 : vector<3x128xf32>
    %c0_14 = arith.constant 0 : index
    %c0_15 = arith.constant 0 : index
    %40 = vector.load %arg3[%c0_14, %c0_15] : memref<3x128xf32, #tpu.memory_space<vmem>>, vector<3x128xf32>
    tpu.vector_store %arg3[%c0_14, %c0_15], %39 {strides = array<i32>} : memref<3x128xf32, #tpu.memory_space<vmem>>, vector<3x128xf32>,
    return
  }
  func.func @transform_0(%arg0: i32) -> (i32, i32) {
    %c0_i32 = arith.constant 0 : i32
    %c0_i32_0 = arith.constant 0 : i32
    return %c0_i32, %arg0 : i32, i32
  }
  func.func @transform_1(%arg0: i32) -> (i32, i32) {
    %c0_i32 = arith.constant 0 : i32
    %c0_i32_0 = arith.constant 0 : i32
    %c0_i32_1 = arith.constant 0 : i32
    return %c0_i32, %c0_i32_0 : i32, i32
  }
  func.func @transform_2(%arg0: i32) -> (i32, i32) {
    %c0_i32 = arith.constant 0 : i32
    %c0_i32_0 = arith.constant 0 : i32
    return %c0_i32, %arg0 : i32, i32
  }
}

</mosaic_0001>

<llo_original>
// kernel: focuspoints_forward.1
$region0: #{focuspoints_forward.1}
  #allocation0 [shape = 'u32[]', space=smem, size = 0x4, offset = 0x4, fixed_abs, tag = 'smem constant byte address 0x4 - core index']
  #allocation1 [shape = 'u32[72,128]{1,0:T(1,128)}', space=vmem, size = 0x9000, scoped, tag = 'internal scratch']
  %s0 = inlined_call_operand.vmem [shape: f32[2,128], index: 0, kind: input, shape index: {}]
  %s1 = inlined_call_operand.hbm [shape: f32[56,128], index: 1, kind: input, shape index: {}]
  %s2 = inlined_call_operand.vmem [shape: f32[3,128], index: 2, kind: output, shape index: {}]
  %s3 = sld [smem:[#allocation0]]
  $region22: #{focuspoints_forward.1} parent=0
    _
  %s5 = ssub.s32 1, %s3
  %s6 = scalar_select 0, %s5, %s3
  $region1: #{focuspoints_forward.1} parent=0
    #allocation2 [shape = 'u8[28672]{0}', space=vmem, size = 0x7000, scoped, tag = 'input window, operand 1, single buffered']
    #allocation3 [shape = 's32[1]{0}', space=sflag, size = 0x4, scoped, tag = 'scoped memory for focuspoints_forward.1']
    %7 = vsyncpa [#allocation3], 0
    // Predicated region
    $region2: #{focuspoints_forward.1} parent=1 // pred_check
      _
    $region3: #{focuspoints_forward.1} parent=1 // pred_check_branch
      %9 = sbr.rel (0) target = $region5
    $region4: #{focuspoints_forward.1} parent=1 // pred_region
      _
    $region5: #{focuspoints_forward.1} parent=1 // pred_fallthru
      _
    // Predicated region
    $region6: #{focuspoints_forward.1} parent=1 // pred_check
      _
    $region7: #{focuspoints_forward.1} parent=1 // pred_check_branch
      %11 = sbr.rel (0) target = $region9
    $region8: #{focuspoints_forward.1} parent=1 // pred_region
      %13 = vsyncadd [#allocation3], 0
      %s14 = sshll.u32 %s1, 4
      %s15 = int_to_ptr.hbm [resolvable:$true] %s14
      %s16 = sshll.u32 [#allocation2], 4
      %s17 = int_to_ptr.vmem [resolvable:$true] %s16
      %22 = dma.hbm_to_vmem [thread:$0]  %s15, 896, %s17, [#allocation3], 128, 128, 8
    $region9: #{focuspoints_forward.1} parent=1 // pred_fallthru
      _
    // Predicated region
    $region10: #{focuspoints_forward.1} parent=1 // pred_check
      _
    $region11: #{focuspoints_forward.1} parent=1 // pred_check_branch
      %24 = sbr.rel (0) target = $region13
    $region12: #{focuspoints_forward.1} parent=1 // pred_region
      %26 = dma.done [#allocation3], 896
    $region13: #{focuspoints_forward.1} parent=1 // pred_fallthru
      _
    %v27 = vld [vmem:[%s0] sm:$0x1]
    %v28 = vld [vmem:[%s0 + $0x1] sm:$0x1]
    %v29 = vld [vmem:[#allocation2] sm:$0xff]
    %v30 = vld [vmem:[#allocation2 + $0x8] sm:$0xff]
    %v31 = vld [vmem:[#allocation2 + $0x10] sm:$0xff]
    %v32 = vld [vmem:[#allocation2 + $0x18] sm:$0xff]
    %34 = vset.pattern.permute.xlu0 0
    %35 = vperm.xlu0 %34, %v29
    %v36 = vpop.permute.xlu0 %35
    %39 = vset.pattern.permute.xlu0 0
    %40 = vperm.xlu0 %39, %v30
    %v41 = vpop.permute.xlu0 %40
    %44 = vset.pattern.permute.xlu0 0
    %45 = vperm.xlu0 %44, %v31
    %v46 = vpop.permute.xlu0 %45
    %49 = vset.pattern.permute.xlu0 0
    %50 = vperm.xlu0 %49, %v32
    %v51 = vpop.permute.xlu0 %50
    %v53 = vperm.slane %v27, 0
    %v54 = vmul.f32 %v36, %v53
    %v55 = vmul.f32 %v41, %v53
    %v56 = vmul.f32 %v46, %v53
    %v57 = vmul.f32 %v51, %v53
    %58 = vset.pattern.permute.xlu0 1
    %59 = vperm.xlu0 %58, %v29
    %v60 = vpop.permute.xlu0 %59
    %62 = vset.pattern.permute.xlu0 1
    %63 = vperm.xlu0 %62, %v30
    %v64 = vpop.permute.xlu0 %63
    %66 = vset.pattern.permute.xlu0 1
    %67 = vperm.xlu0 %66, %v31
    %v68 = vpop.permute.xlu0 %67
    %70 = vset.pattern.permute.xlu0 1
    %71 = vperm.xlu0 %70, %v32
    %v72 = vpop.permute.xlu0 %71
    %v74 = vperm.slane %v28, 0
    %v75 = vmul.f32 %v60, %v74
    %v76 = vmul.f32 %v64, %v74
    %v77 = vmul.f32 %v68, %v74
    %v78 = vmul.f32 %v72, %v74
    %v79 = vadd.f32 %v54, %v75
    %v80 = vadd.f32 %v55, %v76
    %v81 = vadd.f32 %v56, %v77
    %v82 = vadd.f32 %v57, %v78
    %83 = vset.pattern.permute.xlu0 2
    %84 = vperm.xlu0 %83, %v29
    %v85 = vpop.permute.xlu0 %84
    %87 = vset.pattern.permute.xlu0 2
    %88 = vperm.xlu0 %87, %v30
    %v89 = vpop.permute.xlu0 %88
    %91 = vset.pattern.permute.xlu0 2
    %92 = vperm.xlu0 %91, %v31
    %v93 = vpop.permute.xlu0 %92
    %95 = vset.pattern.permute.xlu0 2
    %96 = vperm.xlu0 %95, %v32
    %v97 = vpop.permute.xlu0 %96
    %v99 = vadd.f32 %v79, %v85
    %v100 = vadd.f32 %v80, %v89
    %v101 = vadd.f32 %v81, %v93
    %v102 = vadd.f32 %v82, %v97
    %vm103 = vcmp.gt.f32.partialorder %v99, 20.0
    %vm104 = vcmp.gt.f32.partialorder %v100, 20.0
    %vm105 = vcmp.gt.f32.partialorder %v101, 20.0
    %vm106 = vcmp.gt.f32.partialorder %v102, 20.0
    %v107 = vmul.f32 %v99, 1.442695
    %v108 = vpow.pop %v107
    %v109 = vmul.f32 %v100, 1.442695
    %v110 = vpow.pop %v109
    %v111 = vmul.f32 %v101, 1.442695
    %v112 = vpow.pop %v111
    %v113 = vmul.f32 %v102, 1.442695
    %v114 = vpow.pop %v113
    %v115 = vadd.f32 %v108, 1.0
    %v116 = vlog2.pop %v115
    %v117 = vmul.f32 %v116, 0.6931472
    %v118 = vmul.f32 -0.5, %v108
    %v119 = vadd.f32 %v118, 1.0
    %v120 = vmul.f32 %v119, %v108
    %v121 = vand.u32 2147483647, %v108
    %vm122 = vcmp.lt.f32.partialorder %v121, 0.0004427343
    %v123 = vsel %vm122, %v120, %v117
    %v124 = vadd.f32 %v110, 1.0
    %v125 = vlog2.pop %v124
    %v126 = vmul.f32 %v125, 0.6931472
    %v127 = vmul.f32 -0.5, %v110
    %v128 = vadd.f32 %v127, 1.0
    %v129 = vmul.f32 %v128, %v110
    %v130 = vand.u32 2147483647, %v110
    %vm131 = vcmp.lt.f32.partialorder %v130, 0.0004427343
    %v132 = vsel %vm131, %v129, %v126
    %v133 = vadd.f32 %v112, 1.0
    %v134 = vlog2.pop %v133
    %v135 = vmul.f32 %v134, 0.6931472
    %v136 = vmul.f32 -0.5, %v112
    %v137 = vadd.f32 %v136, 1.0
    %v138 = vmul.f32 %v137, %v112
    %v139 = vand.u32 2147483647, %v112
    %vm140 = vcmp.lt.f32.partialorder %v139, 0.0004427343
    %v141 = vsel %vm140, %v138, %v135
    %v142 = vadd.f32 %v114, 1.0
    %v143 = vlog2.pop %v142
    %v144 = vmul.f32 %v143, 0.6931472
    %v145 = vmul.f32 -0.5, %v114
    %v146 = vadd.f32 %v145, 1.0
    %v147 = vmul.f32 %v146, %v114
    %v148 = vand.u32 2147483647, %v114
    %vm149 = vcmp.lt.f32.partialorder %v148, 0.0004427343
    %v150 = vsel %vm149, %v147, %v144
    %v151 = vsel %vm103, %v99, %v123
    %v152 = vsel %vm104, %v100, %v132
    %v153 = vsel %vm105, %v101, %v141
    %v154 = vsel %vm106, %v102, %v150
    %v155 = vld [vmem:[#allocation2 + $0x20] sm:$0xff]
    %v156 = vld [vmem:[#allocation2 + $0x28] sm:$0xff]
    %158 = vset.pattern.permute.xlu0 32
    %159 = vperm.xlu0 %158, %v155
    %v160 = vpop.permute.xlu0 %159
    %163 = vset.pattern.permute.xlu0 32
    %164 = vperm.xlu0 %163, %v156
    %v165 = vpop.permute.xlu0 %164
    %vm167 = vcmask 261120
    %v168 = vsel %vm167, %v155, 0
    %v170 = vsel %vm167, %v156, 0
    %172 = vmatpush.msra.mxu0 0.0
    %173 = vmatpush.msra.mxu0 0.0
    %174 = vmatpush.msra.mxu0 0.0
    %175 = vmatpush.msra.mxu0 0.0
    %176 = vmatpush.msra.mxu0 0.0
    %177 = vmatpush.msra.mxu0 0.0
    %178 = vmatpush.msra.mxu0 0.0
    %179 = vmatpush.msra.mxu0 0.0
    %180 = vmatpush.msra.mxu0 0.0
    %181 = vmatpush.msra.mxu0 0.0
    %182 = vmatpush.msra.mxu0 0.0
    %183 = vmatpush.msra.mxu0 0.0
    %184 = vmatpush.msra.mxu0 %v154
    %185 = vmatpush.msra.mxu0 %v153
    %186 = vmatpush.msra.mxu0 %v152
    %187 = vmatpush.msra.mxu0 %v151
    %188 = vmatmul.f32.gmra.mxu0 %v168
    %v189 = vpop.f32.mrf.mxu0
    %v190 = vadd.f32 %v160, %v189
    %191 = vmatmul.f32.gmra.mxu0 %v170
    %v192 = vpop.f32.mrf.mxu0
    %v193 = vadd.f32 %v165, %v192
    %194 = vdwg.mxu0
    %vm195 = vcmp.gt.f32.partialorder %v190, 20.0
    %vm196 = vcmp.gt.f32.partialorder %v193, 20.0
    %v197 = vmul.f32 %v190, 1.442695
    %v198 = vpow.pop %v197
    %v199 = vmul.f32 %v193, 1.442695
    %v200 = vpow.pop %v199
    %v201 = vadd.f32 %v198, 1.0
    %v202 = vlog2.pop %v201
    %v203 = vmul.f32 %v202, 0.6931472
    %v204 = vmul.f32 -0.5, %v198
    %v205 = vadd.f32 %v204, 1.0
    %v206 = vmul.f32 %v205, %v198
    %v207 = vand.u32 2147483647, %v198
    %vm208 = vcmp.lt.f32.partialorder %v207, 0.0004427343
    %v209 = vsel %vm208, %v206, %v203
    %v210 = vadd.f32 %v200, 1.0
    %v211 = vlog2.pop %v210
    %v212 = vmul.f32 %v211, 0.6931472
    %v213 = vmul.f32 -0.5, %v200
    %v214 = vadd.f32 %v213, 1.0
    %v215 = vmul.f32 %v214, %v200
    %v216 = vand.u32 2147483647, %v200
    %vm217 = vcmp.lt.f32.partialorder %v216, 0.0004427343
    %v218 = vsel %vm217, %v215, %v212
    %v219 = vsel %vm195, %v190, %v209
    %v220 = vsel %vm196, %v193, %v218
    %v221 = vld [vmem:[#allocation2 + $0x30] sm:$0xff]
    %v222 = vld [vmem:[#allocation2 + $0x30] sm:$0x7]
    %vm223 = vcmask 130048
    %v225 = vsel %vm223, %v221, 0
    %227 = vmatpush.msra.mxu0 0.0
    %228 = vmatpush.msra.mxu0 0.0
    %229 = vmatpush.msra.mxu0 0.0
    %230 = vmatpush.msra.mxu0 0.0
    %231 = vmatpush.msra.mxu0 0.0
    %232 = vmatpush.msra.mxu0 0.0
    %233 = vmatpush.msra.mxu0 0.0
    %234 = vmatpush.msra.mxu0 0.0
    %235 = vmatpush.msra.mxu0 0.0
    %236 = vmatpush.msra.mxu0 0.0
    %237 = vmatpush.msra.mxu0 0.0
    %238 = vmatpush.msra.mxu0 0.0
    %239 = vmatpush.msra.mxu0 0.0
    %240 = vmatpush.msra.mxu0 0.0
    %241 = vmatpush.msra.mxu0 %v220
    %242 = vmatpush.msra.mxu0 %v219
    %243 = vmatmul.f32.gmra.mxu0 %v225
    %v244 = vpop.f32.mrf.mxu0
    %v245 = vadd.f32 0.0, %v244
    %246 = vdwg.mxu0
    %248 = vset.pattern.permute.xlu0 16
    %249 = vperm.xlu0 %248, %v222
    %v250 = vpop.permute.xlu0 %249
    %v252 = vadd.f32 %v245, %v250
    %v253 = vtanh.pop %v252
    %254 = vset.pattern.permute.xlu0 17
    %255 = vperm.xlu0 %254, %v222
    %v256 = vpop.permute.xlu0 %255
    %v258 = vmul.f32 %v253, %v256
    %259 = vst [vmem:[%s2] sm:$0x7] %v258
    // Predicated region
    $region14: #{focuspoints_forward.1} parent=1 // pred_check
      _
    $region15: #{focuspoints_forward.1} parent=1 // pred_check_branch
      %261 = sbr.rel (0) target = $region17
    $region16: #{focuspoints_forward.1} parent=1 // pred_region
      _
    $region17: #{focuspoints_forward.1} parent=1 // pred_fallthru
      _
    // Predicated region
    $region18: #{focuspoints_forward.1} parent=1 // pred_check
      _
    $region19: #{focuspoints_forward.1} parent=1 // pred_check_branch
      %263 = sbr.rel (0) target = $region21
    $region20: #{focuspoints_forward.1} parent=1 // pred_region
      _
    $region21: #{focuspoints_forward.1} parent=1 // pred_fallthru
      _
    %264 = vsyncpa [#allocation3], 1

</llo_original>
